<compile_context>
chip_gen: v7x
topology: tpu7x:2x2x1
jax: 0.10.0
libtpu: 0.0.40
codegen_flags: <defaults>
</compile_context>

<pallas_src>
import jax
import jax.numpy as jnp
from jax.experimental import pallas as pl
from jax.experimental.pallas import tpu as pltpu

SUB = 16  # batch-tile granularity: covers bf16 sublane packing (16 rows / vreg)


# ----------------------------- kernel ---------------------------------------


def mlp_kernel(x_ref, w1_ref, b1_ref, w2_ref, b2_ref, w3_ref, b3_ref,
               w4_ref, b4_ref, out_ref):
    def leaky(v):
        return jnp.where(v > 0, v, 0.1 * v)

    # BN already folded into weights/biases; dropout is identity in eval mode.
    # bf16 operands feed the MXU (native on v5e/v6e/v7x); accumulation, bias add
    # and LeakyReLU stay in f32.
    h = leaky(jnp.dot(x_ref[...], w1_ref[...],
                      preferred_element_type=jnp.float32) + b1_ref[...])
    h = leaky(jnp.dot(h.astype(jnp.bfloat16), w2_ref[...],
                      preferred_element_type=jnp.float32) + b2_ref[...])
    h = leaky(jnp.dot(h.astype(jnp.bfloat16), w3_ref[...],
                      preferred_element_type=jnp.float32) + b3_ref[...])

    # Output layer has out_features=1: VPU lane reduction in f32 (no underfilled
    # MXU pass); written directly to the narrow (tile_b, 1) output block.
    y = jnp.sum(h * w4_ref[...], axis=-1, keepdims=True) + b4_ref[...]
    out_ref[...] = y


# ----------------------------- wrapper ---------------------------------------


def neural_network_forward(x, folded, *, max_tile_b=2048):
    """x: (B, F) float32. folded: dict of BN-folded weights/biases (w1..w3 bf16)."""
    B, F = x.shape
    max_tile_b = max(SUB, (max_tile_b // SUB) * SUB)

    # bf16 x at the pallas_call boundary halves the HBM read stream; the matmul
    # operands are bf16 anyway (f32 accumulation inside the kernel).
    x = x.astype(jnp.bfloat16)

    # Pad batch to the sublane/packing granularity and pick a batch tile.
    b_pad = ((B + SUB - 1) // SUB) * SUB
    tile_b = min(b_pad, max_tile_b)
    if b_pad >= 2 * SUB and b_pad < 2 * tile_b:
        # Guarantee >= 2 grid steps so the "parallel" batch axis can shard across
        # v7x's two TensorCores (no effect on single-TC v5e/v6e).
        b_pad = ((b_pad + 2 * SUB - 1) // (2 * SUB)) * (2 * SUB)
        tile_b = b_pad // 2
    b_pad = ((b_pad + tile_b - 1) // tile_b) * tile_b
    if b_pad != B:
        x = jnp.pad(x, ((0, b_pad - B), (0, 0)))
    grid = (b_pad // tile_b,)

    args = (
        x,
        folded["w1"], folded["b1"],
        folded["w2"], folded["b2"],
        folded["w3"], folded["b3"],
        folded["w4"], folded["b4"],
    )

    def resident_spec(arr):  # weights/biases: same block every grid step -> stay in VMEM
        return pl.BlockSpec(arr.shape, lambda i: (0, 0))

    in_specs = [pl.BlockSpec((tile_b, F), lambda i: (i, 0))]
    in_specs += [resident_spec(a) for a in args[1:]]
    out_specs = pl.BlockSpec((tile_b, 1), lambda i: (i, 0))

    flops = 2 * b_pad * (F * 128 + 128 * 64 + 64 * 32 + 32)
    bytes_accessed = sum(int(a.size) * a.dtype.itemsize for a in args) + b_pad * 4

    out = pl.pallas_call(
        mlp_kernel,
        out_shape=jax.ShapeDtypeStruct((b_pad, 1), jnp.float32),
        grid=grid,
        in_specs=in_specs,
        out_specs=out_specs,
        compiler_params=pltpu.CompilerParams(
            dimension_semantics=("parallel",)),
        cost_estimate=pl.CostEstimate(
            flops=flops, transcendentals=0, bytes_accessed=bytes_accessed),
    )(*args)
    return out[:B]


# ----------------------- parameter construction ------------------------------


def fold_bn(gamma, beta, running_mean, running_var, eps=1e-5):
    """BatchNorm1d (eval) -> per-feature scale/shift (1-D)."""
    scale = gamma / jnp.sqrt(running_var + eps)
    shift = beta - running_mean * scale
    return scale, shift


def fold_params(raw):
    """Fold input BN + per-layer BN into the Linear weights/biases.

    W' = diag(s_in) @ W * s_out,  b' = (t_in @ W + b) * s_out + t_out.
    Matmul weights are stored bf16 (MXU operands); biases / output row stay f32.
    """
    s0, t0 = fold_bn(*raw["bn0"])
    s1, t1 = fold_bn(*raw["bn1"])
    s2, t2 = fold_bn(*raw["bn2"])
    s3, t3 = fold_bn(*raw["bn3"])

    w1 = (s0[:, None] * raw["w1"]) * s1[None, :]
    b1 = ((t0 @ raw["w1"]) + raw["b1"]) * s1 + t1
    w2 = raw["w2"] * s2[None, :]
    b2 = raw["b2"] * s2 + t2
    w3 = raw["w3"] * s3[None, :]
    b3 = raw["b3"] * s3 + t3

    return {
        "w1": w1.astype(jnp.bfloat16), "b1": b1[None, :].astype(jnp.float32),
        "w2": w2.astype(jnp.bfloat16), "b2": b2[None, :].astype(jnp.float32),
        "w3": w3.astype(jnp.bfloat16), "b3": b3[None, :].astype(jnp.float32),
        "w4": raw["w4"].reshape(1, -1).astype(jnp.float32),  # (1, 32) row for lane reduction
        "b4": raw["b4"].reshape(1, 1).astype(jnp.float32),
    }


def make_params(input_size, key):
    """Deterministic synthetic parameters matching the PyTorch module's shapes."""
    dims = [(input_size, 128), (128, 64), (64, 32), (32, 1)]
    keys = jax.random.split(key, 32)
    raw = {}

    def make_bn(n, k0, k1, k2, k3):
        g = 1.0 + 0.1 * jax.random.normal(k0, (n,), jnp.float32)
        b = 0.1 * jax.random.normal(k1, (n,), jnp.float32)
        rm = 0.05 * jax.random.normal(k2, (n,), jnp.float32)
        rv = 1.0 + 0.1 * jax.random.uniform(k3, (n,), jnp.float32)
        return (g, b, rm, rv)

    raw["bn0"] = make_bn(input_size, *keys[0:4])
    ki = 4
    for li, (din, dout) in enumerate(dims, start=1):
        bound = 1.0 / float(din) ** 0.5
        raw[f"w{li}"] = jax.random.uniform(
            keys[ki], (din, dout), jnp.float32, -bound, bound)
        raw[f"b{li}"] = jax.random.uniform(
            keys[ki + 1], (dout,), jnp.float32, -bound, bound)
        ki += 2
        if li <= 3:  # BatchNorm1d after the first three linears
            raw[f"bn{li}"] = make_bn(dout, *keys[ki:ki + 4])
            ki += 4
    return raw


# ----------------------------- reference --------------------------------------


def reference_forward(x, raw):
    """Pure-JAX eval-mode forward with explicit (unfolded) f32 BN math."""
    def bn(v, g, b, rm, rv, eps=1e-5):
        return (v - rm) / jnp.sqrt(rv + eps) * g + b

    def leaky(v):
        return jnp.where(v > 0, v, 0.1 * v)

    h = bn(x, *raw["bn0"])
    h = leaky(bn(h @ raw["w1"] + raw["b1"], *raw["bn1"]))
    h = leaky(bn(h @ raw["w2"] + raw["b2"], *raw["bn2"]))
    h = leaky(bn(h @ raw["w3"] + raw["b3"], *raw["bn3"]))
    return h @ raw["w4"] + raw["b4"]


if __name__ == "__main__":
    input_size = 16
    batch = 8

    key = jax.random.PRNGKey(0)
    kx, kp = jax.random.split(key)
    x = jax.random.normal(kx, (batch, input_size), jnp.float32)

    raw = make_params(input_size, kp)
    folded = fold_params(raw)

    out = neural_network_forward(x, folded)
    out = jax.block_until_ready(out)

    ref = reference_forward(x, raw)
    assert out.shape == (batch, 1)
    # bf16 MXU operands + BN folding round-off: validate with a loose tolerance.
    assert jnp.allclose(out, ref, atol=5e-2, rtol=5e-2), "kernel mismatch vs reference"

    print("KERNEL_OK")
</pallas_src>

<mosaic_0001>
module attributes {stable_mosaic.version = 11 : i64} {
  func.func @mlp_kernel(%arg0: i32, %arg1: memref<16x16xbf16, #tpu.memory_space<vmem>>, %arg2: memref<16x128xbf16, #tpu.memory_space<vmem>>, %arg3: memref<1x128xf32, #tpu.memory_space<vmem>>, %arg4: memref<128x64xbf16, #tpu.memory_space<vmem>>, %arg5: memref<1x64xf32, #tpu.memory_space<vmem>>, %arg6: memref<64x32xbf16, #tpu.memory_space<vmem>>, %arg7: memref<1x32xf32, #tpu.memory_space<vmem>>, %arg8: memref<1x32xf32, #tpu.memory_space<vmem>>, %arg9: memref<1x1xf32, #tpu.memory_space<vmem>>, %arg10: memref<16x1xf32, #tpu.memory_space<vmem>>) attributes {dimension_semantics = [#tpu.dimension_semantics<parallel>], iteration_bounds = array<i64: 1>, scalar_prefetch = 0 : i64, scratch_operands = 0 : i64, tpu.core_type = #tpu.core_type<tc>, window_params = [{transform_indices = @transform_0, window_bounds = array<i64: 16, 16>}, {pipeline_mode = #tpu.pipeline_mode<synchronous>, transform_indices = @transform_1, window_bounds = array<i64: 16, 128>}, {pipeline_mode = #tpu.pipeline_mode<synchronous>, transform_indices = @transform_2, window_bounds = array<i64: 1, 128>}, {pipeline_mode = #tpu.pipeline_mode<synchronous>, transform_indices = @transform_3, window_bounds = array<i64: 128, 64>}, {pipeline_mode = #tpu.pipeline_mode<synchronous>, transform_indices = @transform_4, window_bounds = array<i64: 1, 64>}, {pipeline_mode = #tpu.pipeline_mode<synchronous>, transform_indices = @transform_5, window_bounds = array<i64: 64, 32>}, {pipeline_mode = #tpu.pipeline_mode<synchronous>, transform_indices = @transform_6, window_bounds = array<i64: 1, 32>}, {pipeline_mode = #tpu.pipeline_mode<synchronous>, transform_indices = @transform_7, window_bounds = array<i64: 1, 32>}, {pipeline_mode = #tpu.pipeline_mode<synchronous>, transform_indices = @transform_8, window_bounds = array<i64: 1, 1>}, {transform_indices = @transform_9, window_bounds = array<i64: 16, 1>}]} {
    %c0 = arith.constant 0 : index
    %c0_0 = arith.constant 0 : index
    %0 = vector.load %arg1[%c0, %c0_0] : memref<16x16xbf16, #tpu.memory_space<vmem>>, vector<16x16xbf16>
    %c0_1 = arith.constant 0 : index
    %c0_2 = arith.constant 0 : index
    %1 = vector.load %arg2[%c0_1, %c0_2] : memref<16x128xbf16, #tpu.memory_space<vmem>>, vector<16x128xbf16>
    %cst = arith.constant dense<0.000000e+00> : vector<16x128xf32>
    %2 = tpu.matmul %0, %1, %cst {dimension_numbers = #tpu.dot_dimension_numbers<[1], [0], [0], [1], [0, 0, 1, 1], [], []>} : vector<16x16xbf16>, vector<16x128xbf16>, vector<16x128xf32> -> vector<16x128xf32>
    %c0_3 = arith.constant 0 : index
    %c0_4 = arith.constant 0 : index
    %3 = vector.load %arg3[%c0_3, %c0_4] : memref<1x128xf32, #tpu.memory_space<vmem>>, vector<1x128xf32>
    %4 = vector.broadcast %3 : vector<1x128xf32> to vector<16x128xf32>
    %5 = arith.addf %2, %4 : vector<16x128xf32>
    %cst_5 = arith.constant 0.000000e+00 : f32
    %6 = vector.broadcast %cst_5 : f32 to vector<16x128xf32>
    %7 = arith.cmpf ogt, %5, %6 : vector<16x128xf32>
    %cst_6 = arith.constant 1.000000e-01 : f32
    %8 = vector.broadcast %cst_6 : f32 to vector<16x128xf32>
    %9 = arith.mulf %8, %5 : vector<16x128xf32>
    %10 = arith.select %7, %5, %9 : vector<16x128xi1>, vector<16x128xf32>
    %11 = arith.truncf %10 : vector<16x128xf32> to vector<16x128xbf16>
    %c0_7 = arith.constant 0 : index
    %c0_8 = arith.constant 0 : index
    %12 = vector.load %arg4[%c0_7, %c0_8] : memref<128x64xbf16, #tpu.memory_space<vmem>>, vector<128x64xbf16>
    %cst_9 = arith.constant dense<0.000000e+00> : vector<16x64xf32>
    %13 = tpu.matmul %11, %12, %cst_9 {dimension_numbers = #tpu.dot_dimension_numbers<[1], [0], [0], [1], [0, 0, 1, 1], [], []>} : vector<16x128xbf16>, vector<128x64xbf16>, vector<16x64xf32> -> vector<16x64xf32>
    %c0_10 = arith.constant 0 : index
    %c0_11 = arith.constant 0 : index
    %14 = vector.load %arg5[%c0_10, %c0_11] : memref<1x64xf32, #tpu.memory_space<vmem>>, vector<1x64xf32>
    %15 = vector.broadcast %14 : vector<1x64xf32> to vector<16x64xf32>
    %16 = arith.addf %13, %15 : vector<16x64xf32>
    %cst_12 = arith.constant 0.000000e+00 : f32
    %17 = vector.broadcast %cst_12 : f32 to vector<16x64xf32>
    %18 = arith.cmpf ogt, %16, %17 : vector<16x64xf32>
    %cst_13 = arith.constant 1.000000e-01 : f32
    %19 = vector.broadcast %cst_13 : f32 to vector<16x64xf32>
    %20 = arith.mulf %19, %16 : vector<16x64xf32>
    %21 = arith.select %18, %16, %20 : vector<16x64xi1>, vector<16x64xf32>
    %22 = arith.truncf %21 : vector<16x64xf32> to vector<16x64xbf16>
    %c0_14 = arith.constant 0 : index
    %c0_15 = arith.constant 0 : index
    %23 = vector.load %arg6[%c0_14, %c0_15] : memref<64x32xbf16, #tpu.memory_space<vmem>>, vector<64x32xbf16>
    %cst_16 = arith.constant dense<0.000000e+00> : vector<16x32xf32>
    %24 = tpu.matmul %22, %23, %cst_16 {dimension_numbers = #tpu.dot_dimension_numbers<[1], [0], [0], [1], [0, 0, 1, 1], [], []>} : vector<16x64xbf16>, vector<64x32xbf16>, vector<16x32xf32> -> vector<16x32xf32>
    %c0_17 = arith.constant 0 : index
    %c0_18 = arith.constant 0 : index
    %25 = vector.load %arg7[%c0_17, %c0_18] : memref<1x32xf32, #tpu.memory_space<vmem>>, vector<1x32xf32>
    %26 = vector.broadcast %25 : vector<1x32xf32> to vector<16x32xf32>
    %27 = arith.addf %24, %26 : vector<16x32xf32>
    %cst_19 = arith.constant 0.000000e+00 : f32
    %28 = vector.broadcast %cst_19 : f32 to vector<16x32xf32>
    %29 = arith.cmpf ogt, %27, %28 : vector<16x32xf32>
    %cst_20 = arith.constant 1.000000e-01 : f32
    %30 = vector.broadcast %cst_20 : f32 to vector<16x32xf32>
    %31 = arith.mulf %30, %27 : vector<16x32xf32>
    %32 = arith.select %29, %27, %31 : vector<16x32xi1>, vector<16x32xf32>
    %c0_21 = arith.constant 0 : index
    %c0_22 = arith.constant 0 : index
    %33 = vector.load %arg8[%c0_21, %c0_22] : memref<1x32xf32, #tpu.memory_space<vmem>>, vector<1x32xf32>
    %34 = vector.broadcast %33 : vector<1x32xf32> to vector<16x32xf32>
    %35 = arith.mulf %32, %34 : vector<16x32xf32>
    %cst_23 = arith.constant dense<0.000000e+00> : vector<16xf32>
    %36 = vector.multi_reduction <add>, %35, %cst_23 [1] : vector<16x32xf32> to vector<16xf32>
    %37 = vector.shape_cast %36 : vector<16xf32> to vector<16x1xf32>
    %c0_24 = arith.constant 0 : index
    %c0_25 = arith.constant 0 : index
    %38 = vector.load %arg9[%c0_24, %c0_25] : memref<1x1xf32, #tpu.memory_space<vmem>>, vector<1x1xf32>
    %39 = vector.broadcast %38 : vector<1x1xf32> to vector<16x1xf32>
    %40 = arith.addf %37, %39 : vector<16x1xf32>
    %c0_26 = arith.constant 0 : index
    %c0_27 = arith.constant 0 : index
    %41 = vector.load %arg10[%c0_26, %c0_27] : memref<16x1xf32, #tpu.memory_space<vmem>>, vector<16x1xf32>
    tpu.vector_store %arg10[%c0_26, %c0_27], %40 {strides = array<i32>} : memref<16x1xf32, #tpu.memory_space<vmem>>, vector<16x1xf32>,
    return
  }
  func.func @transform_0(%arg0: i32) -> (i32, i32) {
    %c0_i32 = arith.constant 0 : i32
    %c0_i32_0 = arith.constant 0 : i32
    return %arg0, %c0_i32 : i32, i32
  }
  func.func @transform_1(%arg0: i32) -> (i32, i32) {
    %c0_i32 = arith.constant 0 : i32
    %c0_i32_0 = arith.constant 0 : i32
    %c0_i32_1 = arith.constant 0 : i32
    return %c0_i32, %c0_i32_0 : i32, i32
  }
  func.func @transform_2(%arg0: i32) -> (i32, i32) {
    %c0_i32 = arith.constant 0 : i32
    %c0_i32_0 = arith.constant 0 : i32
    %c0_i32_1 = arith.constant 0 : i32
    return %c0_i32, %c0_i32_0 : i32, i32
  }
  func.func @transform_3(%arg0: i32) -> (i32, i32) {
    %c0_i32 = arith.constant 0 : i32
    %c0_i32_0 = arith.constant 0 : i32
    %c0_i32_1 = arith.constant 0 : i32
    return %c0_i32, %c0_i32_0 : i32, i32
  }
  func.func @transform_4(%arg0: i32) -> (i32, i32) {
    %c0_i32 = arith.constant 0 : i32
    %c0_i32_0 = arith.constant 0 : i32
    %c0_i32_1 = arith.constant 0 : i32
    return %c0_i32, %c0_i32_0 : i32, i32
  }
  func.func @transform_5(%arg0: i32) -> (i32, i32) {
    %c0_i32 = arith.constant 0 : i32
    %c0_i32_0 = arith.constant 0 : i32
    %c0_i32_1 = arith.constant 0 : i32
    return %c0_i32, %c0_i32_0 : i32, i32
  }
  func.func @transform_6(%arg0: i32) -> (i32, i32) {
    %c0_i32 = arith.constant 0 : i32
    %c0_i32_0 = arith.constant 0 : i32
    %c0_i32_1 = arith.constant 0 : i32
    return %c0_i32, %c0_i32_0 : i32, i32
  }
  func.func @transform_7(%arg0: i32) -> (i32, i32) {
    %c0_i32 = arith.constant 0 : i32
    %c0_i32_0 = arith.constant 0 : i32
    %c0_i32_1 = arith.constant 0 : i32
    return %c0_i32, %c0_i32_0 : i32, i32
  }
  func.func @transform_8(%arg0: i32) -> (i32, i32) {
    %c0_i32 = arith.constant 0 : i32
    %c0_i32_0 = arith.constant 0 : i32
    %c0_i32_1 = arith.constant 0 : i32
    return %c0_i32, %c0_i32_0 : i32, i32
  }
  func.func @transform_9(%arg0: i32) -> (i32, i32) {
    %c0_i32 = arith.constant 0 : i32
    %c0_i32_0 = arith.constant 0 : i32
    return %arg0, %c0_i32 : i32, i32
  }
}

</mosaic_0001>

<llo_original>
// kernel: tpu_custom_call.1
$region0: #{tpu_custom_call.1}
  #allocation0 [shape = 'u32[]', space=smem, size = 0x4, offset = 0x4, fixed_abs, tag = 'smem constant byte address 0x4 - core index']
  #allocation1 [shape = 'u32[144,128]{1,0:T(1,128)}', space=vmem, size = 0x12000, scoped, tag = 'internal scratch']
  #allocation2 [shape = 'f32[1,1]{1,0:T(1,128)S(1)}', space=vmem, size = 0x200, scoped, tag = 'scoped memory for tpu_custom_call.1']
  %s0 = inlined_call_operand.vmem [shape: bf16[16,16], index: 0, kind: input, shape index: {}]
  %s1 = inlined_call_operand.vmem [shape: bf16[16,128], index: 1, kind: input, shape index: {}]
  %s2 = inlined_call_operand.vmem [shape: f32[1,128], index: 2, kind: input, shape index: {}]
  %s3 = inlined_call_operand.vmem [shape: bf16[128,64], index: 3, kind: input, shape index: {}]
  %s4 = inlined_call_operand.vmem [shape: f32[1,64], index: 4, kind: input, shape index: {}]
  %s5 = inlined_call_operand.vmem [shape: bf16[64,32], index: 5, kind: input, shape index: {}]
  %s6 = inlined_call_operand.vmem [shape: f32[1,32], index: 6, kind: input, shape index: {}]
  %s7 = inlined_call_operand.vmem [shape: f32[1,32], index: 7, kind: input, shape index: {}]
  %s8 = inlined_call_operand.<no memory space> [shape: f32[1,1], index: 8, kind: input, shape index: {}]
  %s9 = inlined_call_operand.vmem [shape: f32[16,1], index: 9, kind: output, shape index: {}]
  %s10 = sld [smem:[#allocation0]]
  $region46: #{tpu_custom_call.1} parent=0
    _
  %s12 = ssub.s32 1, %s10
  %s13 = scalar_select 0, %s12, %s10
  %v14 = vstv %s8
  %15 = vst [vmem:[#allocation2] sm:$0x1] %v14
  // Predicated region
  $region2: #{tpu_custom_call.1} parent=0 // pred_check
    _
  $region3: #{tpu_custom_call.1} parent=0 // pred_check_branch
    %17 = sbr.rel (0) target = $region5
  $region4: #{tpu_custom_call.1} parent=0 // pred_region
    _
  $region5: #{tpu_custom_call.1} parent=0 // pred_fallthru
    _
  // Predicated region
  $region6: #{tpu_custom_call.1} parent=0 // pred_check
    _
  $region7: #{tpu_custom_call.1} parent=0 // pred_check_branch
    %19 = sbr.rel (0) target = $region9
  $region8: #{tpu_custom_call.1} parent=0 // pred_region
    _
  $region9: #{tpu_custom_call.1} parent=0 // pred_fallthru
    _
  // Predicated region
  $region10: #{tpu_custom_call.1} parent=0 // pred_check
    _
  $region11: #{tpu_custom_call.1} parent=0 // pred_check_branch
    %21 = sbr.rel (0) target = $region13
  $region12: #{tpu_custom_call.1} parent=0 // pred_region
    _
  $region13: #{tpu_custom_call.1} parent=0 // pred_fallthru
    _
  // Predicated region
  $region14: #{tpu_custom_call.1} parent=0 // pred_check
    _
  $region15: #{tpu_custom_call.1} parent=0 // pred_check_branch
    %23 = sbr.rel (0) target = $region17
  $region16: #{tpu_custom_call.1} parent=0 // pred_region
    _
  $region17: #{tpu_custom_call.1} parent=0 // pred_fallthru
    _
  // Predicated region
  $region18: #{tpu_custom_call.1} parent=0 // pred_check
    _
  $region19: #{tpu_custom_call.1} parent=0 // pred_check_branch
    %25 = sbr.rel (0) target = $region21
  $region20: #{tpu_custom_call.1} parent=0 // pred_region
    _
  $region21: #{tpu_custom_call.1} parent=0 // pred_fallthru
    _
  // Predicated region
  $region22: #{tpu_custom_call.1} parent=0 // pred_check
    _
  $region23: #{tpu_custom_call.1} parent=0 // pred_check_branch
    %27 = sbr.rel (0) target = $region25
  $region24: #{tpu_custom_call.1} parent=0 // pred_region
    _
  $region25: #{tpu_custom_call.1} parent=0 // pred_fallthru
    _
  // Predicated region
  $region26: #{tpu_custom_call.1} parent=0 // pred_check
    _
  $region27: #{tpu_custom_call.1} parent=0 // pred_check_branch
    %29 = sbr.rel (0) target = $region29
  $region28: #{tpu_custom_call.1} parent=0 // pred_region
    _
  $region29: #{tpu_custom_call.1} parent=0 // pred_fallthru
    _
  // Predicated region
  $region30: #{tpu_custom_call.1} parent=0 // pred_check
    _
  $region31: #{tpu_custom_call.1} parent=0 // pred_check_branch
    %31 = sbr.rel (0) target = $region33
  $region32: #{tpu_custom_call.1} parent=0 // pred_region
    _
  $region33: #{tpu_custom_call.1} parent=0 // pred_fallthru
    _
  // Predicated region
  $region34: #{tpu_custom_call.1} parent=0 // pred_check
    _
  $region35: #{tpu_custom_call.1} parent=0 // pred_check_branch
    %33 = sbr.rel (0) target = $region37
  $region36: #{tpu_custom_call.1} parent=0 // pred_region
    _
  $region37: #{tpu_custom_call.1} parent=0 // pred_fallthru
    _
  %v35 = vld [vmem:[%s0] sm:$0xf]
  %v36 = vld [vmem:[%s0 + $0x4] sm:$0xf]
  %v37 = vld [vmem:[%s1] sm:$0xf]
  %v38 = vld [vmem:[%s1 + $0x4] sm:$0xf]
  %v39 = vld [vmem:[%s2] sm:$0x1]
  %v41 = vlaneseq
  %v42 = vshrl.u32 %v41, 7
  %v43 = vsub.s32 0, %v42
  %v44 = vrot.slane %v39, %v43
  %v48 = vunpack.c.l.b16 %v35
  %v49 = vunpack.c.l.b16 %v36
  %v50 = vpack.c.b16 %v49, %v48
  %v53 = vunpack.c.l.b16 %v37
  %v54 = vunpack.c.l.b16 %v38
  %v55 = vpack.c.b16 %v54, %v53
  %vm57 = vcmask 130048
  %v59 = vsel %vm57, %v50, 0
  %61 = vmatprep.subr.bf16.mxu0 0
  %62 = vmatpush1.bf16.msra.mxu0 %v55
  %63 = vmatprep.subr.bf16.mxu0 0
  %64 = vmatpush1.bf16.msra.mxu0 0
  %65 = vmatprep.subr.bf16.mxu0 0
  %66 = vmatpush1.bf16.msra.mxu0 0
  %67 = vmatprep.subr.bf16.mxu0 0
  %68 = vmatpush1.bf16.msra.mxu0 0
  %69 = vmatprep.subr.bf16.mxu0 0
  %70 = vmatpush1.bf16.msra.mxu0 0
  %71 = vmatprep.subr.bf16.mxu0 0
  %72 = vmatpush1.bf16.msra.mxu0 0
  %73 = vmatprep.subr.bf16.mxu0 0
  %74 = vmatpush1.bf16.msra.mxu0 0
  %75 = vmatprep.subr.bf16.mxu0 0
  %76 = vmatpush1.bf16.msra.mxu0 0
  %77 = vmatprep.subr.bf16.mxu0 0
  %78 = vmatpush1.bf16.msra.mxu0 0
  %79 = vmatprep.subr.bf16.mxu0 0
  %80 = vmatpush1.bf16.msra.mxu0 0
  %81 = vmatprep.subr.bf16.mxu0 0
  %82 = vmatpush1.bf16.msra.mxu0 0
  %83 = vmatprep.subr.bf16.mxu0 0
  %84 = vmatpush1.bf16.msra.mxu0 0
  %85 = vmatprep.subr.bf16.mxu0 0
  %86 = vmatpush1.bf16.msra.mxu0 0
  %87 = vmatprep.subr.bf16.mxu0 0
  %88 = vmatpush1.bf16.msra.mxu0 0
  %89 = vmatprep.subr.bf16.mxu0 0
  %90 = vmatpush1.bf16.msra.mxu0 0
  %91 = vmatprep.subr.bf16.mxu0 0
  %92 = vmatpush1.bf16.msra.mxu0 0
  %93 = vmatprep.mubr.bf16.mxu0 0
  %94 = vmatmul.mubr.bf16.gmra.mrb[0].mxu0 %v59
  %v95 = vpop.f32.mrb[0].mxu0
  %v96 = vadd.f32 %v44, %v95
  %v97 = vpop.f32.mrb[0].mxu0
  %v98 = vpop.f32.mrb[0].mxu0
  %v99 = vadd.f32 %v44, %v98
  %v100 = vpop.f32.mrb[0].mxu0
  %101 = vdwg.mxu0
  %vm102 = vcmp.gt.f32.partialorder %v96, 0.0
  %vm103 = vcmp.gt.f32.partialorder %v99, 0.0
  %v104 = vmul.f32 %v96, 0.1
  %v105 = vmul.f32 %v99, 0.1
  %v106 = vsel %vm102, %v96, %v104
  %v107 = vsel %vm103, %v99, %v105
  %v108 = vpack.c.bf16 %v107, %v106
  %v109 = vld [vmem:[%s3] sm:$0xf]
  %v110 = vld [vmem:[%s3 + $0x4] sm:$0xf]
  %v111 = vld [vmem:[%s3 + $0x8] sm:$0xf]
  %v112 = vld [vmem:[%s3 + $0xc] sm:$0xf]
  %v113 = vld [vmem:[%s3 + $0x10] sm:$0xf]
  %v114 = vld [vmem:[%s3 + $0x14] sm:$0xf]
  %v115 = vld [vmem:[%s3 + $0x18] sm:$0xf]
  %v116 = vld [vmem:[%s3 + $0x1c] sm:$0xf]
  %v117 = vld [vmem:[%s3 + $0x20] sm:$0xf]
  %v118 = vld [vmem:[%s3 + $0x24] sm:$0xf]
  %v119 = vld [vmem:[%s3 + $0x28] sm:$0xf]
  %v120 = vld [vmem:[%s3 + $0x2c] sm:$0xf]
  %v121 = vld [vmem:[%s3 + $0x30] sm:$0xf]
  %v122 = vld [vmem:[%s3 + $0x34] sm:$0xf]
  %v123 = vld [vmem:[%s3 + $0x38] sm:$0xf]
  %v124 = vld [vmem:[%s3 + $0x3c] sm:$0xf]
  %v125 = vld [vmem:[%s4] sm:$0x1]
  %v127 = vlaneseq
  %v128 = vshrl.u32 %v127, 7
  %v129 = vsub.s32 0, %v128
  %v130 = vrot.slane %v125, %v129
  %v148 = vunpack.c.l.b16 %v109
  %v149 = vunpack.c.l.b16 %v110
  %v150 = vunpack.c.l.b16 %v111
  %v151 = vunpack.c.l.b16 %v112
  %v152 = vunpack.c.l.b16 %v113
  %v153 = vunpack.c.l.b16 %v114
  %v154 = vunpack.c.l.b16 %v115
  %v155 = vunpack.c.l.b16 %v116
  %v156 = vunpack.c.l.b16 %v117
  %v157 = vunpack.c.l.b16 %v118
  %v158 = vunpack.c.l.b16 %v119
  %v159 = vunpack.c.l.b16 %v120
  %v160 = vunpack.c.l.b16 %v121
  %v161 = vunpack.c.l.b16 %v122
  %v162 = vunpack.c.l.b16 %v123
  %v163 = vunpack.c.l.b16 %v124
  %v164 = vpack.c.b16 %v149, %v148
  %v165 = vpack.c.b16 %v151, %v150
  %v166 = vpack.c.b16 %v153, %v152
  %v167 = vpack.c.b16 %v155, %v154
  %v168 = vpack.c.b16 %v157, %v156
  %v169 = vpack.c.b16 %v159, %v158
  %v170 = vpack.c.b16 %v161, %v160
  %v171 = vpack.c.b16 %v163, %v162
  %180 = vmatprep.subr.bf16.mxu0 0
  %181 = vmatpush1.bf16.msra.mxu0 %v164
  %182 = vmatprep.subr.bf16.mxu0 0
  %183 = vmatpush1.bf16.msra.mxu0 %v165
  %184 = vmatprep.subr.bf16.mxu0 0
  %185 = vmatpush1.bf16.msra.mxu0 %v166
  %186 = vmatprep.subr.bf16.mxu0 0
  %187 = vmatpush1.bf16.msra.mxu0 %v167
  %188 = vmatprep.subr.bf16.mxu0 0
  %189 = vmatpush1.bf16.msra.mxu0 %v168
  %190 = vmatprep.subr.bf16.mxu0 0
  %191 = vmatpush1.bf16.msra.mxu0 %v169
  %192 = vmatprep.subr.bf16.mxu0 0
  %193 = vmatpush1.bf16.msra.mxu0 %v170
  %194 = vmatprep.subr.bf16.mxu0 0
  %195 = vmatpush1.bf16.msra.mxu0 %v171
  %196 = vmatprep.subr.bf16.mxu0 0
  %197 = vmatpush1.bf16.msra.mxu0 0
  %198 = vmatprep.subr.bf16.mxu0 0
  %199 = vmatpush1.bf16.msra.mxu0 0
  %200 = vmatprep.subr.bf16.mxu0 0
  %201 = vmatpush1.bf16.msra.mxu0 0
  %202 = vmatprep.subr.bf16.mxu0 0
  %203 = vmatpush1.bf16.msra.mxu0 0
  %204 = vmatprep.subr.bf16.mxu0 0
  %205 = vmatpush1.bf16.msra.mxu0 0
  %206 = vmatprep.subr.bf16.mxu0 0
  %207 = vmatpush1.bf16.msra.mxu0 0
  %208 = vmatprep.subr.bf16.mxu0 0
  %209 = vmatpush1.bf16.msra.mxu0 0
  %210 = vmatprep.subr.bf16.mxu0 0
  %211 = vmatpush1.bf16.msra.mxu0 0
  %212 = vmatprep.mubr.bf16.mxu0 0
  %213 = vmatmul.mubr.bf16.gmra.mrb[0].mxu0 %v108
  %v214 = vpop.f32.mrb[0].mxu0
  %v215 = vadd.f32 %v130, %v214
  %v216 = vpop.f32.mrb[0].mxu0
  %v217 = vpop.f32.mrb[0].mxu0
  %v218 = vadd.f32 %v130, %v217
  %v219 = vpop.f32.mrb[0].mxu0
  %220 = vdwg.mxu0
  %vm221 = vcmp.gt.f32.partialorder %v215, 0.0
  %vm222 = vcmp.gt.f32.partialorder %v218, 0.0
  %v223 = vmul.f32 %v215, 0.1
  %v224 = vmul.f32 %v218, 0.1
  %v225 = vsel %vm221, %v215, %v223
  %v226 = vsel %vm222, %v218, %v224
  %v227 = vpack.c.bf16 %v226, %v225
  %v228 = vld [vmem:[%s5] sm:$0xf]
  %v229 = vld [vmem:[%s5 + $0x4] sm:$0xf]
  %v230 = vld [vmem:[%s5 + $0x8] sm:$0xf]
  %v231 = vld [vmem:[%s5 + $0xc] sm:$0xf]
  %v232 = vld [vmem:[%s5 + $0x10] sm:$0xf]
  %v233 = vld [vmem:[%s5 + $0x14] sm:$0xf]
  %v234 = vld [vmem:[%s5 + $0x18] sm:$0xf]
  %v235 = vld [vmem:[%s5 + $0x1c] sm:$0xf]
  %v236 = vld [vmem:[%s6] sm:$0x1]
  %v238 = vlaneseq
  %v239 = vshrl.u32 %v238, 7
  %v240 = vsub.s32 0, %v239
  %v241 = vrot.slane %v236, %v240
  %v251 = vunpack.c.l.b16 %v228
  %v252 = vunpack.c.l.b16 %v229
  %v253 = vunpack.c.l.b16 %v230
  %v254 = vunpack.c.l.b16 %v231
  %v255 = vunpack.c.l.b16 %v232
  %v256 = vunpack.c.l.b16 %v233
  %v257 = vunpack.c.l.b16 %v234
  %v258 = vunpack.c.l.b16 %v235
  %v259 = vpack.c.b16 %v252, %v251
  %v260 = vpack.c.b16 %v254, %v253
  %v261 = vpack.c.b16 %v256, %v255
  %v262 = vpack.c.b16 %v258, %v257
  %vm267 = vcmask 523264
  %v269 = vsel %vm267, %v227, 0
  %271 = vmatprep.subr.bf16.mxu0 0
  %272 = vmatpush1.bf16.msra.mxu0 %v259
  %273 = vmatprep.subr.bf16.mxu0 0
  %274 = vmatpush1.bf16.msra.mxu0 %v260
  %275 = vmatprep.subr.bf16.mxu0 0
  %276 = vmatpush1.bf16.msra.mxu0 %v261
  %277 = vmatprep.subr.bf16.mxu0 0
  %278 = vmatpush1.bf16.msra.mxu0 %v262
  %279 = vmatprep.subr.bf16.mxu0 0
  %280 = vmatpush1.bf16.msra.mxu0 0
  %281 = vmatprep.subr.bf16.mxu0 0
  %282 = vmatpush1.bf16.msra.mxu0 0
  %283 = vmatprep.subr.bf16.mxu0 0
  %284 = vmatpush1.bf16.msra.mxu0 0
  %285 = vmatprep.subr.bf16.mxu0 0
  %286 = vmatpush1.bf16.msra.mxu0 0
  %287 = vmatprep.subr.bf16.mxu0 0
  %288 = vmatpush1.bf16.msra.mxu0 0
  %289 = vmatprep.subr.bf16.mxu0 0
  %290 = vmatpush1.bf16.msra.mxu0 0
  %291 = vmatprep.subr.bf16.mxu0 0
  %292 = vmatpush1.bf16.msra.mxu0 0
  %293 = vmatprep.subr.bf16.mxu0 0
  %294 = vmatpush1.bf16.msra.mxu0 0
  %295 = vmatprep.subr.bf16.mxu0 0
  %296 = vmatpush1.bf16.msra.mxu0 0
  %297 = vmatprep.subr.bf16.mxu0 0
  %298 = vmatpush1.bf16.msra.mxu0 0
  %299 = vmatprep.subr.bf16.mxu0 0
  %300 = vmatpush1.bf16.msra.mxu0 0
  %301 = vmatprep.subr.bf16.mxu0 0
  %302 = vmatpush1.bf16.msra.mxu0 0
  %303 = vmatprep.mubr.bf16.mxu0 0
  %304 = vmatmul.mubr.bf16.gmra.mrb[0].mxu0 %v269
  %v305 = vpop.f32.mrb[0].mxu0
  %v306 = vadd.f32 %v241, %v305
  %v307 = vpop.f32.mrb[0].mxu0
  %v308 = vpop.f32.mrb[0].mxu0
  %v309 = vadd.f32 %v241, %v308
  %v310 = vpop.f32.mrb[0].mxu0
  %311 = vdwg.mxu0
  %vm312 = vcmp.gt.f32.partialorder %v306, 0.0
  %vm313 = vcmp.gt.f32.partialorder %v309, 0.0
  %v314 = vmul.f32 %v306, 0.1
  %v315 = vmul.f32 %v309, 0.1
  %v316 = vsel %vm312, %v306, %v314
  %v317 = vsel %vm313, %v309, %v315
  %v318 = vld [vmem:[%s7] sm:$0x1]
  %v320 = vlaneseq
  %v321 = vshrl.u32 %v320, 7
  %v322 = vsub.s32 0, %v321
  %v323 = vrot.slane %v318, %v322
  %v325 = vmul.f32 %v316, %v323
  %v326 = vmul.f32 %v317, %v323
  %vm327 = vcmask 261120
  %v328 = vsel %vm327, %v325, 0.0
  %329 = vadd.xlane.f32.xlu0 %v328
  %v330 = vpop.xlane.xlu0 %329
  %v331 = vsel %vm327, %v326, 0.0
  %332 = vadd.xlane.f32.xlu0 %v331
  %v333 = vpop.xlane.xlu0 %332
  %v334 = vld [vmem:[#allocation2] sm:$0x1]
  %v336 = vlaneseq
  %v337 = vshrl.u32 %v336, 7
  %v338 = vsub.s32 0, %v337
  %v339 = vrot.slane %v334, %v338
  %v341 = vadd.f32 %v330, %v339
  %v342 = vadd.f32 %v333, %v339
  %vm343 = vcmask 7168
  %344 = vst.msk [vmem:[%s9] sm:$0xff] %vm343, %v341
  %345 = vst.msk [vmem:[%s9 + $0x8] sm:$0xff] %vm343, %v342
  // Predicated region
  $region38: #{tpu_custom_call.1} parent=0 // pred_check
    _
  $region39: #{tpu_custom_call.1} parent=0 // pred_check_branch
    %347 = sbr.rel (0) target = $region41
  $region40: #{tpu_custom_call.1} parent=0 // pred_region
    _
  $region41: #{tpu_custom_call.1} parent=0 // pred_fallthru
    _
  // Predicated region
  $region42: #{tpu_custom_call.1} parent=0 // pred_check
    _
  $region43: #{tpu_custom_call.1} parent=0 // pred_check_branch
    %349 = sbr.rel (0) target = $region45
  $region44: #{tpu_custom_call.1} parent=0 // pred_region
    _
  $region45: #{tpu_custom_call.1} parent=0 // pred_fallthru
    _

</llo_original>
